<compile_context>
chip_gen: v7x
topology: tpu7x:2x2x1
jax: 0.10.0
libtpu: 0.0.40
codegen_flags: <defaults>
</compile_context>

<pallas_src>
import jax
import jax.numpy as jnp
from jax import lax
from jax.experimental import pallas as pl
from jax.experimental.pallas import tpu as pltpu


# -----------------------------------------------------------------------------
# Kernel: per-layer masked-mean sequence embedding.
#   grid = (L1, S // S_TILE); layer axis "parallel", seq axis "arbitrary".
#   hs block     : (B, S_TILE, H)   streamed dtype (f32 or bf16)
#   mask block   : (B, 1, S_TILE)   lane-dense, = attention_mask / token_count
#   accumulator  : (B, 1, H) f32 VMEM scratch, finalized at the last seq step.
# -----------------------------------------------------------------------------
def seq_embed_kernel(hs_ref, maskw_ref, seq_embed_ref, acc_ref):
    s = pl.program_id(1)
    n_s = pl.num_programs(1)

    @pl.when(s == 0)
    def _init():
        acc_ref[...] = jnp.zeros_like(acc_ref)

    hs = hs_ref[...]        # (B, S_TILE, H)
    w = maskw_ref[...]      # (B, 1, S_TILE)
    # Batched (1, S_TILE) @ (S_TILE, H) per batch row -> MXU; f32 accumulate.
    acc_ref[...] += lax.dot_general(
        w, hs,
        dimension_numbers=(((2,), (1,)), ((0,), (0,))),
        preferred_element_type=jnp.float32)

    @pl.when(s == n_s - 1)
    def _finalize():
        seq_embed_ref[...] = acc_ref[...].astype(seq_embed_ref.dtype)


# -----------------------------------------------------------------------------
# Sizing helpers (generation-aware: v5e/v6e 128 MiB VMEM, v7x 64 MiB).
# -----------------------------------------------------------------------------
def _vmem_capacity_bytes():
    try:
        return int(pltpu.get_tpu_info().vmem_capacity_bytes)
    except Exception:
        return 64 << 20          # conservative default = v7x per-TC capacity


def _pick_seq_tile(S, B, H, itemsize, budget_bytes):
    """Largest divisor of S that is either S itself or a multiple of 128 (the
    lane-dense mask block constraint) and whose hs block fits budget_bytes."""
    smallest_valid = S
    for d in range(S, 0, -1):
        if S % d != 0:
            continue
        if d != S and d % 128 != 0:
            continue
        smallest_valid = d
        if B * d * H * itemsize <= budget_bytes:
            return d
    return smallest_valid


def masked_mean_seq_embed(hidden_states, attention_mask, s_tile=None):
    """Pallas masked-mean over tokens for every hidden layer.

    hidden_states : (L1, B, S, H), attention_mask : (B, S)
    returns       : (L1, B, H) float32
    """
    L1, B, S, H = hidden_states.shape

    # Stream hidden_states in their native precision: a standalone f32->bf16
    # cast would add a full extra HBM pass over the dominant tensor.
    if hidden_states.dtype == jnp.bfloat16:
        compute_dtype = jnp.bfloat16
    else:
        compute_dtype = jnp.float32
    hs_stream = hidden_states.astype(compute_dtype)
    itemsize = 2 if compute_dtype == jnp.bfloat16 else 4

    # TODO(synk): utils.get_seq_embed(_type=seq_embed_type) is external; the
    # masked mean over valid tokens is used as the sequence embedding.
    mask = attention_mask.astype(jnp.float32)                 # (B, S)
    counts = jnp.sum(mask, axis=1, keepdims=True)
    inv = jnp.where(counts > 0.0, 1.0 / jnp.maximum(counts, 1.0), 0.0)
    mask_w = (mask * inv).astype(compute_dtype)[:, None, :]   # (B, 1, S) lane-dense

    # Tile + VMEM budget from the chip's actual VMEM capacity.
    vmem_cap = _vmem_capacity_bytes()
    usable = (vmem_cap * 3) // 4
    hs_budget = min(16 << 20, usable // 4)       # per hs block (double-buffered)
    if s_tile is None:
        s_tile = _pick_seq_tile(S, B, H, itemsize, hs_budget)
    assert S % s_tile == 0
    assert s_tile == S or s_tile % 128 == 0
    n_s = S // s_tile

    hs_block = B * s_tile * H * itemsize
    mask_block = B * 8 * s_tile * itemsize       # sublane dim 1 pads to 8
    out_block = B * 8 * H * 4
    scratch_bytes = B * 8 * H * 4
    need = 2 * (hs_block + mask_block + out_block) + scratch_bytes + (2 << 20)
    vmem_limit = int(min(usable, max(need, 16 << 20)))

    seq_embed4 = pl.pallas_call(
        seq_embed_kernel,
        out_shape=jax.ShapeDtypeStruct((L1, B, 1, H), jnp.float32),
        grid_spec=pltpu.PrefetchScalarGridSpec(
            num_scalar_prefetch=0,
            grid=(L1, n_s),
            in_specs=[
                # hs is the HBM-bound stream; if profiles show exposed DMA at
                # tile boundaries, add pipeline_mode=pl.Buffered(3) here only.
                pl.BlockSpec((None, B, s_tile, H), lambda l, s: (l, 0, s, 0)),
                pl.BlockSpec((B, 1, s_tile), lambda l, s: (0, 0, s)),
            ],
            out_specs=pl.BlockSpec((None, B, 1, H), lambda l, s: (l, 0, 0, 0)),
            scratch_shapes=[pltpu.VMEM((B, 1, H), jnp.float32)],
        ),
        compiler_params=pltpu.CompilerParams(
            dimension_semantics=("parallel", "arbitrary"),
            vmem_limit_bytes=vmem_limit),
    )(hs_stream, mask_w)

    return seq_embed4[:, :, 0, :]                              # (L1, B, H)


# -----------------------------------------------------------------------------
# Wrapper: remaining (micro-sized) losses in plain JAX, fused by XLA.
# -----------------------------------------------------------------------------
def model_wrapper_train_forward(hidden_states, attention_mask, params,
                                w_mlm=1.0, w_layers=1.0, w_distance=1.0,
                                w_fake=1.0, w_real=1.0, s_tile=None):
    L1, B, S, H = hidden_states.shape
    C = params["layers_w"].shape[1]
    assert C == L1

    seq_embed_all = masked_mean_seq_embed(hidden_states, attention_mask,
                                          s_tile=s_tile)       # (L1, B, H) f32

    # Layer classifier + per-layer CrossEntropy (labels of layer l are all l).
    # TODO(synk): nn.Dropout before layers_linear is treated as identity.
    logits = (jnp.einsum("lbh,hc->lbc", seq_embed_all,
                         params["layers_w"].astype(jnp.float32))
              + params["layers_b"].astype(jnp.float32).reshape(1, 1, C))
    logp = jax.nn.log_softmax(logits, axis=-1)
    onehot = jax.nn.one_hot(jnp.arange(L1), C, dtype=jnp.float32)   # (L1, C)
    label_logp = jnp.einsum("lbc,lc->lb", logp, onehot)
    layers_loss_sum = -jnp.sum(jnp.mean(label_logp, axis=1))

    # DIALOG_VECTORS distance: dist_l = mean_b |<E_l[b], E_{l-1}[b]>|, l >= 1.
    # TODO(synk): constants.MATRIX_DIST_* selection unknown; DIALOG_VECTORS used.
    diag = jnp.sum(seq_embed_all[1:] * seq_embed_all[:-1], axis=-1)  # (L1-1, B)
    layers_distance_sum = jnp.sum(jnp.mean(jnp.abs(diag), axis=1))

    # GAN losses in plain JAX (micro-sized; no pallas_call).
    # TODO(synk): Generator/Discriminator internals unknown; 2-layer tanh
    # discriminator + fixed generator table stand-ins; b_idx fixed to 0
    # (reference samples random.randrange); constants.FAKE_LABEL assumed == 1.
    EPS = 1e-8
    FAKE_LABEL = 1
    real_x = seq_embed_all[:, 0, :]                            # (L1, H)
    fake_x = params["gen_table"].astype(jnp.float32)           # (L1, H)

    def discriminate(x):
        h = jnp.tanh(x @ params["d_w1"] + params["d_b1"])
        logit = h @ params["d_w2"] + params["d_b2"]
        return h, jax.nn.softmax(logit, axis=-1)

    real_h, real_prob = discriminate(real_x)
    fake_h, fake_prob = discriminate(fake_x)
    d_loss = (-jnp.mean(jnp.log(1.0 - real_prob[:, FAKE_LABEL] + EPS))
              - jnp.mean(jnp.log(fake_prob[:, FAKE_LABEL] + EPS)))
    g_loss = (-jnp.mean(jnp.log(1.0 - fake_prob[:, FAKE_LABEL] + EPS))
              + jnp.mean(jnp.square(jnp.mean(real_h, axis=0)
                                    - jnp.mean(fake_h, axis=0))))

    # TODO(synk): supervised_loss (task_model) and output_mlm.loss (HF MLM
    # head) require external modules not reproducible here; set to 0.
    supervised_loss = jnp.float32(0.0)
    mlm_loss = jnp.float32(0.0)

    loss = (supervised_loss
            + w_mlm * mlm_loss
            + w_layers * layers_loss_sum
            + w_distance * layers_distance_sum
            + w_fake * g_loss
            + w_real * d_loss)
    losses = (supervised_loss, mlm_loss, layers_loss_sum,
              layers_distance_sum, g_loss, d_loss)
    return loss, losses


if __name__ == "__main__":
    # Small, forward-consistent shapes.
    num_hidden_layers = 3          # -> L1 = num_hidden_layers + 1 hidden states
    L1 = num_hidden_layers + 1
    B, S, H = 4, 256, 32           # batch, seq, hidden_size
    C = L1                         # layers_linear output = num_hidden_layers + 1
    F = 16                         # synthetic discriminator feature width

    key = jax.random.PRNGKey(0)
    k_hs, k_lw, k_lb, k_gt, k_d1, k_d2 = jax.random.split(key, 6)

    # Stand-in for output_lm.hidden_states (external LM forward not reproduced).
    hidden_states = jax.random.normal(k_hs, (L1, B, S, H), dtype=jnp.float32)

    # Attention mask: last 19 tokens of row 1 padded out (falls in seq tile 1).
    attention_mask = jnp.ones((B, S), dtype=jnp.float32)
    attention_mask = attention_mask.at[1, -19:].set(0.0)

    params = {
        "layers_w": 0.05 * jax.random.normal(k_lw, (H, C), dtype=jnp.float32),
        "layers_b": 0.01 * jax.random.normal(k_lb, (1, C), dtype=jnp.float32),
        "gen_table": jax.random.normal(k_gt, (L1, H), dtype=jnp.float32),
        "d_w1": 0.05 * jax.random.normal(k_d1, (H, F), dtype=jnp.float32),
        "d_b1": jnp.zeros((F,), dtype=jnp.float32),
        "d_w2": 0.05 * jax.random.normal(k_d2, (F, 2), dtype=jnp.float32),
        "d_b2": jnp.zeros((2,), dtype=jnp.float32),
    }

    # s_tile=128 -> 2 seq tiles per layer: exercises init/accumulate/finalize.
    S_TILE = 128

    # Cross-check the Pallas masked mean against plain JAX (cheap at demo size).
    seq_embed = masked_mean_seq_embed(hidden_states, attention_mask,
                                      s_tile=S_TILE)
    mask = attention_mask.astype(jnp.float32)
    cnt = jnp.maximum(jnp.sum(mask, axis=1, keepdims=True), 1.0)
    w_ref = mask / cnt                                             # (B, S)
    ref = jnp.sum(hidden_states * w_ref[None, :, :, None], axis=2)  # (L1, B, H)
    jax.block_until_ready(seq_embed)
    assert jnp.allclose(seq_embed, ref, atol=1e-2, rtol=1e-2)

    loss, losses = model_wrapper_train_forward(hidden_states, attention_mask,
                                               params, s_tile=S_TILE)
    jax.block_until_ready(loss)
    jax.block_until_ready(losses)
    assert jnp.isfinite(loss)
    print("KERNEL_OK")
</pallas_src>

<mosaic_0001>
module attributes {stable_mosaic.version = 11 : i64} {
  func.func @seq_embed_kernel(%arg0: i32, %arg1: i32, %arg2: memref<1x4x128x32xf32, #tpu.memory_space<vmem>>, %arg3: memref<4x1x128xf32, #tpu.memory_space<vmem>>, %arg4: memref<1x4x1x32xf32, #tpu.memory_space<vmem>>, %arg5: memref<4x1x32xf32, #tpu.memory_space<vmem>>) attributes {dimension_semantics = [#tpu.dimension_semantics<parallel>, #tpu.dimension_semantics<arbitrary>], iteration_bounds = array<i64: 4, 2>, scalar_prefetch = 0 : i64, scratch_operands = 1 : i64, tpu.core_type = #tpu.core_type<tc>, window_params = [{transform_indices = @transform_0, window_bounds = array<i64: 1, 4, 128, 32>}, {transform_indices = @transform_1, window_bounds = array<i64: 4, 1, 128>}, {transform_indices = @transform_2, window_bounds = array<i64: 1, 4, 1, 32>}]} {
    %c0_i32 = arith.constant 0 : i32
    %0 = arith.cmpi eq, %arg1, %c0_i32 : i32
    %1 = arith.extui %0 : i1 to i32
    %c0_i32_0 = arith.constant 0 : i32
    %2 = arith.cmpi ne, %1, %c0_i32_0 : i32
    scf.if %2 {
      %cst_14 = arith.constant 0.000000e+00 : f32
      %13 = vector.broadcast %cst_14 : f32 to vector<4x1x32xf32>
      %c0_15 = arith.constant 0 : index
      %c0_16 = arith.constant 0 : index
      %c0_17 = arith.constant 0 : index
      %14 = vector.load %arg5[%c0_15, %c0_16, %c0_17] : memref<4x1x32xf32, #tpu.memory_space<vmem>>, vector<4x1x32xf32>
      tpu.vector_store %arg5[%c0_15, %c0_16, %c0_17], %13 {strides = array<i32>} : memref<4x1x32xf32, #tpu.memory_space<vmem>>, vector<4x1x32xf32>,
    } else {
    }
    %c0 = arith.constant 0 : index
    %c0_1 = arith.constant 0 : index
    %c0_2 = arith.constant 0 : index
    %c0_3 = arith.constant 0 : index
    %3 = vector.load %arg2[%c0, %c0_1, %c0_2, %c0_3] : memref<1x4x128x32xf32, #tpu.memory_space<vmem>>, vector<1x4x128x32xf32>
    %4 = vector.shape_cast %3 : vector<1x4x128x32xf32> to vector<4x128x32xf32>
    %c0_4 = arith.constant 0 : index
    %c0_5 = arith.constant 0 : index
    %c0_6 = arith.constant 0 : index
    %5 = vector.load %arg3[%c0_4, %c0_5, %c0_6] : memref<4x1x128xf32, #tpu.memory_space<vmem>>, vector<4x1x128xf32>
    %c0_7 = arith.constant 0 : index
    %c0_8 = arith.constant 0 : index
    %c0_9 = arith.constant 0 : index
    %6 = vector.load %arg5[%c0_7, %c0_8, %c0_9] : memref<4x1x32xf32, #tpu.memory_space<vmem>>, vector<4x1x32xf32>
    %cst = arith.constant dense<0.000000e+00> : vector<4x1x32xf32>
    %7 = tpu.matmul %5, %4, %cst {dimension_numbers = #tpu.dot_dimension_numbers<[2], [1], [1], [2], [0, 0, 0, 1, 1, 2], [0], [0]>} : vector<4x1x128xf32>, vector<4x128x32xf32>, vector<4x1x32xf32> -> vector<4x1x32xf32>
    %8 = arith.addf %6, %7 : vector<4x1x32xf32>
    %c0_10 = arith.constant 0 : index
    %c0_11 = arith.constant 0 : index
    %c0_12 = arith.constant 0 : index
    %9 = vector.load %arg5[%c0_10, %c0_11, %c0_12] : memref<4x1x32xf32, #tpu.memory_space<vmem>>, vector<4x1x32xf32>
    tpu.vector_store %arg5[%c0_10, %c0_11, %c0_12], %8 {strides = array<i32>} : memref<4x1x32xf32, #tpu.memory_space<vmem>>, vector<4x1x32xf32>,
    %c1_i32 = arith.constant 1 : i32
    %10 = arith.cmpi eq, %arg1, %c1_i32 : i32
    %11 = arith.extui %10 : i1 to i32
    %c0_i32_13 = arith.constant 0 : i32
    %12 = arith.cmpi ne, %11, %c0_i32_13 : i32
    scf.if %12 {
      %c0_14 = arith.constant 0 : index
      %c0_15 = arith.constant 0 : index
      %c0_16 = arith.constant 0 : index
      %13 = vector.load %arg5[%c0_14, %c0_15, %c0_16] : memref<4x1x32xf32, #tpu.memory_space<vmem>>, vector<4x1x32xf32>
      %c0_17 = arith.constant 0 : index
      %c0_18 = arith.constant 0 : index
      %c0_19 = arith.constant 0 : index
      %c0_20 = arith.constant 0 : index
      %14 = vector.load %arg4[%c0_17, %c0_18, %c0_19, %c0_20] : memref<1x4x1x32xf32, #tpu.memory_space<vmem>>, vector<1x4x1x32xf32>
      %15 = vector.shape_cast %14 : vector<1x4x1x32xf32> to vector<4x1x32xf32>
      %16 = vector.shape_cast %13 : vector<4x1x32xf32> to vector<1x4x1x32xf32>
      tpu.vector_store %arg4[%c0_17, %c0_18, %c0_19, %c0_20], %16 {strides = array<i32>} : memref<1x4x1x32xf32, #tpu.memory_space<vmem>>, vector<1x4x1x32xf32>,
    } else {
    }
    return
  }
  func.func @transform_0(%arg0: i32, %arg1: i32) -> (i32, i32, i32, i32) {
    %c0_i32 = arith.constant 0 : i32
    %c0_i32_0 = arith.constant 0 : i32
    %c0_i32_1 = arith.constant 0 : i32
    return %arg0, %c0_i32, %arg1, %c0_i32_0 : i32, i32, i32, i32
  }
  func.func @transform_1(%arg0: i32, %arg1: i32) -> (i32, i32, i32) {
    %c0_i32 = arith.constant 0 : i32
    %c0_i32_0 = arith.constant 0 : i32
    %c0_i32_1 = arith.constant 0 : i32
    return %c0_i32, %c0_i32_0, %arg1 : i32, i32, i32
  }
  func.func @transform_2(%arg0: i32, %arg1: i32) -> (i32, i32, i32, i32) {
    %c0_i32 = arith.constant 0 : i32
    %c0_i32_0 = arith.constant 0 : i32
    %c0_i32_1 = arith.constant 0 : i32
    %c0_i32_2 = arith.constant 0 : i32
    return %arg0, %c0_i32, %c0_i32_0, %c0_i32_1 : i32, i32, i32, i32
  }
}

</mosaic_0001>

<llo_original>
// kernel: tpu_custom_call.1
$region0: #{tpu_custom_call.1}
  #allocation0 [shape = 'u32[]', space=smem, size = 0x4, offset = 0x4, fixed_abs, tag = 'smem constant byte address 0x4 - core index']
  #allocation1 [shape = 'u32[144,128]{1,0:T(1,128)}', space=vmem, size = 0x12000, scoped, tag = 'internal scratch']
  #allocation2 [shape = 'f32[4,1,32]{2,1,0:T(1,128)}', space=vmem, size = 0x800, scoped, tag = 'scratch operand']
  %s0 = inlined_call_operand.vmem [shape: f32[4,4,256,32], index: 0, kind: input, shape index: {}]
  %s1 = inlined_call_operand.vmem [shape: f32[4,1,256], index: 1, kind: input, shape index: {}]
  %s2 = inlined_call_operand.hbm [shape: f32[4,4,1,32], index: 2, kind: output, shape index: {}]
  %s3 = sld [smem:[#allocation0]]
  $region121: #{tpu_custom_call.1} parent=0
    _
  %s5 = ssub.s32 1, %s3
  %s6 = scalar_select 0, %s5, %s3
  $region1: #{tpu_custom_call.1} parent=0
    #allocation3 [shape = 'u8[524288]{0}', space=vmem, size = 0x80000, scoped, tag = 'input window, operand 0']
    #allocation4 [shape = 'u8[4096]{0}', space=vmem, size = 0x1000, scoped, tag = 'input window, operand 1']
    #allocation5 [shape = 'u8[4096]{0}', space=vmem, size = 0x1000, scoped, tag = 'output window, operand 0']
    #allocation6 [shape = 's32[2]{0}', space=sflag, size = 0x8, scoped, tag = 'scoped memory for tpu_custom_call.1']
    %7 = vsyncpa [#allocation6], 0
    %s8 = scalar_lea.sflag [#allocation6], 1
    %9 = vsyncpa %s8, 0
    loop: start=0, step=1, limit=10
    $region2: #{tpu_custom_call.1} parent=1 // loop_pre_header
      _
    $region3: #{tpu_custom_call.1} parent=1 // loop_header
      %s11 = sphi 0, %s15
      %p12 = scmp.ge.s32.totalorder %s11, 10
      %s18 = sphi 0, %s30
      %s19 = sphi 0, %s26
      %s20 = sphi 0, %s18
      %s21 = sphi 0, %s19
      %s22 = sphi 0, %s20
      %s23 = sphi 0, %s21
      %s35 = sphi 0, %s37
      %s38 = sphi 0, %s35
      %s39 = sphi 0, %s38
      %s55 = sphi 0, %s39
      %s61 = sphi 0, %s63
      %s64 = sphi 0, %s61
      %s65 = sphi 0, %s64
      %s81 = sphi 0, %s65
      %s87 = sphi 0, %s89
      %s90 = sphi 0, %s87
      %s91 = sphi 0, %s90
      %s107 = sphi 0, %s91
    $region4: #{tpu_custom_call.1} parent=1 // loop_header_branch
      %14 = sbr.rel (%p12) target = $region8
    $region5: #{tpu_custom_call.1} parent=1 // loop_body
      %s16 = ssub.s32 %s11, 1
      %s17 = ssub.s32 %s11, 2
      %s24 = sadd.s32 1, %s19
      %p25 = scmp.ge.s32.totalorder %s24, 2
      %s26 = scalar_select %p25, 0, %s24
      %s27 = sadd.s32 1, %s18
      %s28 = scalar_select %p25, %s27, %s18
      %p29 = scmp.ge.s32.totalorder %s28, 4
      %s30 = scalar_select %p29, 0, %s28
      %s31 = ssub.s32 %s18, %s30
      %s32 = ssub.s32 %s19, %s26
      %s33 = sor.u32 %s31, %s32
      %p34 = scmp.eq.s32.totalorder %s33, 0
      %s36 = sadd.s32 %s35, 1
      %s37 = scalar_select %p34, %s35, %s36
      %p40 = pneg %p34
      %p41 = scmp.eq.s32.totalorder %s11, 7
      %p42 = por %p40, %p41
      %p43 = scmp.ne.s32.totalorder %s35, %s38
      %p44 = scmp.eq.s32.totalorder %s11, 0
      %p45 = por %p43, %p44
      %p46 = scmp.ne.s32.totalorder %s35, %s38
      %p47 = scmp.eq.s32.totalorder %s16, 7
      %p48 = por %p46, %p47
      %p49 = scmp.ne.s32.totalorder %s38, %s39
      %p50 = scmp.eq.s32.totalorder %s16, 0
      %p51 = por %p49, %p50
      %p52 = scmp.ne.s32.totalorder %s38, %s39
      %p53 = scmp.eq.s32.totalorder %s17, 7
      %p54 = por %p52, %p53
      %p56 = scmp.ne.s32.totalorder %s39, %s55
      %p57 = scmp.eq.s32.totalorder %s17, 0
      %p58 = por %p56, %p57
      %s59 = ssub.s32 %s19, %s26
      %p60 = scmp.eq.s32.totalorder %s59, 0
      %s62 = sadd.s32 %s61, 1
      %s63 = scalar_select %p60, %s61, %s62
      %p66 = pneg %p60
      %p67 = scmp.eq.s32.totalorder %s11, 7
      %p68 = por %p66, %p67
      %p69 = scmp.ne.s32.totalorder %s61, %s64
      %p70 = scmp.eq.s32.totalorder %s11, 0
      %p71 = por %p69, %p70
      %p72 = scmp.ne.s32.totalorder %s61, %s64
      %p73 = scmp.eq.s32.totalorder %s16, 7
      %p74 = por %p72, %p73
      %p75 = scmp.ne.s32.totalorder %s64, %s65
      %p76 = scmp.eq.s32.totalorder %s16, 0
      %p77 = por %p75, %p76
      %p78 = scmp.ne.s32.totalorder %s64, %s65
      %p79 = scmp.eq.s32.totalorder %s17, 7
      %p80 = por %p78, %p79
      %p82 = scmp.ne.s32.totalorder %s65, %s81
      %p83 = scmp.eq.s32.totalorder %s17, 0
      %p84 = por %p82, %p83
      %s85 = ssub.s32 %s18, %s30
      %p86 = scmp.eq.s32.totalorder %s85, 0
      %s88 = sadd.s32 %s87, 1
      %s89 = scalar_select %p86, %s87, %s88
      %p92 = pneg %p86
      %p93 = scmp.eq.s32.totalorder %s11, 7
      %p94 = por %p92, %p93
      %p95 = scmp.ne.s32.totalorder %s87, %s90
      %p96 = scmp.eq.s32.totalorder %s11, 0
      %p97 = por %p95, %p96
      %p98 = scmp.ne.s32.totalorder %s87, %s90
      %p99 = scmp.eq.s32.totalorder %s16, 7
      %p100 = por %p98, %p99
      %p101 = scmp.ne.s32.totalorder %s90, %s91
      %p102 = scmp.eq.s32.totalorder %s16, 0
      %p103 = por %p101, %p102
      %p104 = scmp.ne.s32.totalorder %s90, %s91
      %p105 = scmp.eq.s32.totalorder %s17, 7
      %p106 = por %p104, %p105
      %p108 = scmp.ne.s32.totalorder %s91, %s107
      %p109 = scmp.eq.s32.totalorder %s17, 0
      %p110 = por %p108, %p109
      %p111 = scmp.le.s32.totalorder 1, %s11
      %p112 = scmp.lt.s32.totalorder %s11, 9
      %p113 = pnand %p111, %p112
      %p114 = pneg %p113
      // Predicated region
      $region9: #{tpu_custom_call.1} parent=5 // pred_check
        _
      $region10: #{tpu_custom_call.1} parent=5 // pred_check_branch
        %116 = sbr.rel (%p113) target = $region12
      $region11: #{tpu_custom_call.1} parent=5 // pred_region
        %s117 = ssub.s32 %s11, 1
      $region12: #{tpu_custom_call.1} parent=5 // pred_fallthru
        _
      %p118 = scmp.lt.s32.totalorder %s11, 8
      // Predicated region
      $region13: #{tpu_custom_call.1} parent=5 // pred_check
        %p119 = pneg %p118
      $region14: #{tpu_custom_call.1} parent=5 // pred_check_branch
        %121 = sbr.rel (%p119) target = $region16
      $region15: #{tpu_custom_call.1} parent=5 // pred_region
        // Predicated region
        $region17: #{tpu_custom_call.1} parent=15 // pred_check
          %p122 = pneg %p45
        $region18: #{tpu_custom_call.1} parent=15 // pred_check_branch
          %124 = sbr.rel (%p122) target = $region20
        $region19: #{tpu_custom_call.1} parent=15 // pred_region
          %s125 = sand.u32 %s35, 1
          %s126 = sand.u32 %s35, 1
          %s127 = smul.addr %s126, 512
          %s128 = scalar_lea.vmem [#allocation3], %s127
          %s129 = smul.u32 16, %s19
          %s130 = smul.addr %s18, 128
          %s131 = sadd.s32 %s129, %s130
          %s132 = smul.addr %s131, 8
          %s133 = scalar_lea.vmem %s0, %s132
          // Predicated region
          $region21: #{tpu_custom_call.1} parent=19 // pred_check
            _
          $region22: #{tpu_custom_call.1} parent=19 // pred_check_branch
            %135 = sbr.rel (0) target = $region24
          $region23: #{tpu_custom_call.1} parent=19 // pred_region
            // Predicated region
            $region25: #{tpu_custom_call.1} parent=23 // pred_check
              _
            $region26: #{tpu_custom_call.1} parent=23 // pred_check_branch
              %137 = sbr.rel (0) target = $region28
            $region27: #{tpu_custom_call.1} parent=23 // pred_region
              // Predicated region
              $region40: #{tpu_custom_call.1} parent=27 // pred_check
                _
              $region41: #{tpu_custom_call.1} parent=27 // pred_check_branch
                %278 = sbr.rel (0) target = $region43
              $region42: #{tpu_custom_call.1} parent=27 // pred_region
                loop: start=0, step=1, limit=1
                $region44: #{tpu_custom_call.1} parent=42 // loop_pre_header
                  _
                $region45: #{tpu_custom_call.1} parent=42 // loop_header
                  %s280 = sphi 0, %s284
                  %p281 = scmp.ge.s32.totalorder %s280, 1
                  %s285 = sphi %s133, %s133
                  %s286 = sphi %s128, %s128
                $region46: #{tpu_custom_call.1} parent=42 // loop_header_branch
                  %283 = sbr.rel (%p281) target = $region50
                $region47: #{tpu_custom_call.1} parent=42 // loop_body
                  %v287 = vld [vmem:[%s285] sm:$0xff]
                  %288 = vst [vmem:[%s286] sm:$0xff] %v287
                  %v289 = vld [vmem:[%s285 + $0x8] sm:$0xff]
                  %290 = vst [vmem:[%s286 + $0x8] sm:$0xff] %v289
                  %v291 = vld [vmem:[%s285 + $0x10] sm:$0xff]
                  %292 = vst [vmem:[%s286 + $0x10] sm:$0xff] %v291
                  %v293 = vld [vmem:[%s285 + $0x18] sm:$0xff]
                  %294 = vst [vmem:[%s286 + $0x18] sm:$0xff] %v293
                  %v295 = vld [vmem:[%s285 + $0x20] sm:$0xff]
                  %296 = vst [vmem:[%s286 + $0x20] sm:$0xff] %v295
                  %v297 = vld [vmem:[%s285 + $0x28] sm:$0xff]
                  %298 = vst [vmem:[%s286 + $0x28] sm:$0xff] %v297
                  %v299 = vld [vmem:[%s285 + $0x30] sm:$0xff]
                  %300 = vst [vmem:[%s286 + $0x30] sm:$0xff] %v299
                  %v301 = vld [vmem:[%s285 + $0x38] sm:$0xff]
                  %302 = vst [vmem:[%s286 + $0x38] sm:$0xff] %v301
                  %v303 = vld [vmem:[%s285 + $0x40] sm:$0xff]
                  %304 = vst [vmem:[%s286 + $0x40] sm:$0xff] %v303
                  %v305 = vld [vmem:[%s285 + $0x48] sm:$0xff]
                  %306 = vst [vmem:[%s286 + $0x48] sm:$0xff] %v305
                  %v307 = vld [vmem:[%s285 + $0x50] sm:$0xff]
                  %308 = vst [vmem:[%s286 + $0x50] sm:$0xff] %v307
                  %v309 = vld [vmem:[%s285 + $0x58] sm:$0xff]
                  %310 = vst [vmem:[%s286 + $0x58] sm:$0xff] %v309
                  %v311 = vld [vmem:[%s285 + $0x60] sm:$0xff]
                  %312 = vst [vmem:[%s286 + $0x60] sm:$0xff] %v311
                  %v313 = vld [vmem:[%s285 + $0x68] sm:$0xff]
                  %314 = vst [vmem:[%s286 + $0x68] sm:$0xff] %v313
                  %v315 = vld [vmem:[%s285 + $0x70] sm:$0xff]
                  %316 = vst [vmem:[%s286 + $0x70] sm:$0xff] %v315
                  %v317 = vld [vmem:[%s285 + $0x78] sm:$0xff]
                  %318 = vst [vmem:[%s286 + $0x78] sm:$0xff] %v317
                  %v319 = vld [vmem:[%s285 + $0x100] sm:$0xff]
                  %320 = vst [vmem:[%s286 + $0x80] sm:$0xff] %v319
                  %v321 = vld [vmem:[%s285 + $0x108] sm:$0xff]
                  %322 = vst [vmem:[%s286 + $0x88] sm:$0xff] %v321
                  %v323 = vld [vmem:[%s285 + $0x110] sm:$0xff]
                  %324 = vst [vmem:[%s286 + $0x90] sm:$0xff] %v323
                  %v325 = vld [vmem:[%s285 + $0x118] sm:$0xff]
                  %326 = vst [vmem:[%s286 + $0x98] sm:$0xff] %v325
                  %v327 = vld [vmem:[%s285 + $0x120] sm:$0xff]
                  %328 = vst [vmem:[%s286 + $0xa0] sm:$0xff] %v327
                  %v329 = vld [vmem:[%s285 + $0x128] sm:$0xff]
                  %330 = vst [vmem:[%s286 + $0xa8] sm:$0xff] %v329
                  %v331 = vld [vmem:[%s285 + $0x130] sm:$0xff]
                  %332 = vst [vmem:[%s286 + $0xb0] sm:$0xff] %v331
                  %v333 = vld [vmem:[%s285 + $0x138] sm:$0xff]
                  %334 = vst [vmem:[%s286 + $0xb8] sm:$0xff] %v333
                  %v335 = vld [vmem:[%s285 + $0x140] sm:$0xff]
                  %336 = vst [vmem:[%s286 + $0xc0] sm:$0xff] %v335
                  %v337 = vld [vmem:[%s285 + $0x148] sm:$0xff]
                  %338 = vst [vmem:[%s286 + $0xc8] sm:$0xff] %v337
                  %v339 = vld [vmem:[%s285 + $0x150] sm:$0xff]
                  %340 = vst [vmem:[%s286 + $0xd0] sm:$0xff] %v339
                  %v341 = vld [vmem:[%s285 + $0x158] sm:$0xff]
                  %342 = vst [vmem:[%s286 + $0xd8] sm:$0xff] %v341
                  %v343 = vld [vmem:[%s285 + $0x160] sm:$0xff]
                  %344 = vst [vmem:[%s286 + $0xe0] sm:$0xff] %v343
                  %v345 = vld [vmem:[%s285 + $0x168] sm:$0xff]
                  %346 = vst [vmem:[%s286 + $0xe8] sm:$0xff] %v345
                  %v347 = vld [vmem:[%s285 + $0x170] sm:$0xff]
                  %348 = vst [vmem:[%s286 + $0xf0] sm:$0xff] %v347
                  %v349 = vld [vmem:[%s285 + $0x178] sm:$0xff]
                  %350 = vst [vmem:[%s286 + $0xf8] sm:$0xff] %v349
                  %v351 = vld [vmem:[%s285 + $0x200] sm:$0xff]
                  %352 = vst [vmem:[%s286 + $0x100] sm:$0xff] %v351
                  %v353 = vld [vmem:[%s285 + $0x208] sm:$0xff]
                  %354 = vst [vmem:[%s286 + $0x108] sm:$0xff] %v353
                  %v355 = vld [vmem:[%s285 + $0x210] sm:$0xff]
                  %356 = vst [vmem:[%s286 + $0x110] sm:$0xff] %v355
                  %v357 = vld [vmem:[%s285 + $0x218] sm:$0xff]
                  %358 = vst [vmem:[%s286 + $0x118] sm:$0xff] %v357
                  %v359 = vld [vmem:[%s285 + $0x220] sm:$0xff]
                  %360 = vst [vmem:[%s286 + $0x120] sm:$0xff] %v359
                  %v361 = vld [vmem:[%s285 + $0x228] sm:$0xff]
                  %362 = vst [vmem:[%s286 + $0x128] sm:$0xff] %v361
                  %v363 = vld [vmem:[%s285 + $0x230] sm:$0xff]
                  %364 = vst [vmem:[%s286 + $0x130] sm:$0xff] %v363
                  %v365 = vld [vmem:[%s285 + $0x238] sm:$0xff]
                  %366 = vst [vmem:[%s286 + $0x138] sm:$0xff] %v365
                  %v367 = vld [vmem:[%s285 + $0x240] sm:$0xff]
                  %368 = vst [vmem:[%s286 + $0x140] sm:$0xff] %v367
                  %v369 = vld [vmem:[%s285 + $0x248] sm:$0xff]
                  %370 = vst [vmem:[%s286 + $0x148] sm:$0xff] %v369
                  %v371 = vld [vmem:[%s285 + $0x250] sm:$0xff]
                  %372 = vst [vmem:[%s286 + $0x150] sm:$0xff] %v371
                  %v373 = vld [vmem:[%s285 + $0x258] sm:$0xff]
                  %374 = vst [vmem:[%s286 + $0x158] sm:$0xff] %v373
                  %v375 = vld [vmem:[%s285 + $0x260] sm:$0xff]
                  %376 = vst [vmem:[%s286 + $0x160] sm:$0xff] %v375
                  %v377 = vld [vmem:[%s285 + $0x268] sm:$0xff]
                  %378 = vst [vmem:[%s286 + $0x168] sm:$0xff] %v377
                  %v379 = vld [vmem:[%s285 + $0x270] sm:$0xff]
                  %380 = vst [vmem:[%s286 + $0x170] sm:$0xff] %v379
                  %v381 = vld [vmem:[%s285 + $0x278] sm:$0xff]
                  %382 = vst [vmem:[%s286 + $0x178] sm:$0xff] %v381
                  %v383 = vld [vmem:[%s285 + $0x300] sm:$0xff]
                  %384 = vst [vmem:[%s286 + $0x180] sm:$0xff] %v383
                  %v385 = vld [vmem:[%s285 + $0x308] sm:$0xff]
                  %386 = vst [vmem:[%s286 + $0x188] sm:$0xff] %v385
                  %v387 = vld [vmem:[%s285 + $0x310] sm:$0xff]
                  %388 = vst [vmem:[%s286 + $0x190] sm:$0xff] %v387
                  %v389 = vld [vmem:[%s285 + $0x318] sm:$0xff]
                  %390 = vst [vmem:[%s286 + $0x198] sm:$0xff] %v389
                  %v391 = vld [vmem:[%s285 + $0x320] sm:$0xff]
                  %392 = vst [vmem:[%s286 + $0x1a0] sm:$0xff] %v391
                  %v393 = vld [vmem:[%s285 + $0x328] sm:$0xff]
                  %394 = vst [vmem:[%s286 + $0x1a8] sm:$0xff] %v393
                  %v395 = vld [vmem:[%s285 + $0x330] sm:$0xff]
                  %396 = vst [vmem:[%s286 + $0x1b0] sm:$0xff] %v395
                  %v397 = vld [vmem:[%s285 + $0x338] sm:$0xff]
                  %398 = vst [vmem:[%s286 + $0x1b8] sm:$0xff] %v397
                  %v399 = vld [vmem:[%s285 + $0x340] sm:$0xff]
                  %400 = vst [vmem:[%s286 + $0x1c0] sm:$0xff] %v399
                  %v401 = vld [vmem:[%s285 + $0x348] sm:$0xff]
                  %402 = vst [vmem:[%s286 + $0x1c8] sm:$0xff] %v401
                  %v403 = vld [vmem:[%s285 + $0x350] sm:$0xff]
                  %404 = vst [vmem:[%s286 + $0x1d0] sm:$0xff] %v403
                  %v405 = vld [vmem:[%s285 + $0x358] sm:$0xff]
                  %406 = vst [vmem:[%s286 + $0x1d8] sm:$0xff] %v405
                  %v407 = vld [vmem:[%s285 + $0x360] sm:$0xff]
                  %408 = vst [vmem:[%s286 + $0x1e0] sm:$0xff] %v407
                  %v409 = vld [vmem:[%s285 + $0x368] sm:$0xff]
                  %410 = vst [vmem:[%s286 + $0x1e8] sm:$0xff] %v409
                  %v411 = vld [vmem:[%s285 + $0x370] sm:$0xff]
                  %412 = vst [vmem:[%s286 + $0x1f0] sm:$0xff] %v411
                  %v413 = vld [vmem:[%s285 + $0x378] sm:$0xff]
                  %414 = vst [vmem:[%s286 + $0x1f8] sm:$0xff] %v413
                $region48: #{tpu_custom_call.1} parent=42 // loop_footer
                  %s284 = sadd.s32 1, %s280
                $region49: #{tpu_custom_call.1} parent=42 // loop_footer_branch
                  %279 = sbr.rel target = $region45
                $region50: #{tpu_custom_call.1} parent=42 // loop_exit
                  _
              $region43: #{tpu_custom_call.1} parent=27 // pred_fallthru
                _
              // Predicated region
              $region51: #{tpu_custom_call.1} parent=27 // pred_check
                _
              $region52: #{tpu_custom_call.1} parent=27 // pred_check_branch
                %416 = sbr.rel target = $region54
              $region53: #{tpu_custom_call.1} parent=27 // pred_region
                _
              $region54: #{tpu_custom_call.1} parent=27 // pred_fallthru
                _
            $region28: #{tpu_custom_call.1} parent=23 // pred_fallthru
              _
            // Predicated region
            $region29: #{tpu_custom_call.1} parent=23 // pred_check
              _
            $region30: #{tpu_custom_call.1} parent=23 // pred_check_branch
              %139 = sbr.rel target = $region32
            $region31: #{tpu_custom_call.1} parent=23 // pred_region
              loop: start=0, step=1, limit=1
              $region33: #{tpu_custom_call.1} parent=31 // loop_pre_header
                _
              $region34: #{tpu_custom_call.1} parent=31 // loop_header
                %s142 = sphi 0, %s146
                %p143 = scmp.ge.s32.totalorder %s142, 1
                %s147 = sphi %s133, %s133
                %s148 = sphi %s128, %s128
              $region35: #{tpu_custom_call.1} parent=31 // loop_header_branch
                %145 = sbr.rel (%p143) target = $region39
              $region36: #{tpu_custom_call.1} parent=31 // loop_body
                %v149 = vld [vmem:[%s147] sm:$0xff]
                %150 = vst [vmem:[%s148] sm:$0xff] %v149
                %v151 = vld [vmem:[%s147 + $0x8] sm:$0xff]
                %152 = vst [vmem:[%s148 + $0x8] sm:$0xff] %v151
                %v153 = vld [vmem:[%s147 + $0x10] sm:$0xff]
                %154 = vst [vmem:[%s148 + $0x10] sm:$0xff] %v153
                %v155 = vld [vmem:[%s147 + $0x18] sm:$0xff]
                %156 = vst [vmem:[%s148 + $0x18] sm:$0xff] %v155
                %v157 = vld [vmem:[%s147 + $0x20] sm:$0xff]
                %158 = vst [vmem:[%s148 + $0x20] sm:$0xff] %v157
                %v159 = vld [vmem:[%s147 + $0x28] sm:$0xff]
                %160 = vst [vmem:[%s148 + $0x28] sm:$0xff] %v159
                %v161 = vld [vmem:[%s147 + $0x30] sm:$0xff]
                %162 = vst [vmem:[%s148 + $0x30] sm:$0xff] %v161
                %v163 = vld [vmem:[%s147 + $0x38] sm:$0xff]
                %164 = vst [vmem:[%s148 + $0x38] sm:$0xff] %v163
                %v165 = vld [vmem:[%s147 + $0x40] sm:$0xff]
                %166 = vst [vmem:[%s148 + $0x40] sm:$0xff] %v165
                %v167 = vld [vmem:[%s147 + $0x48] sm:$0xff]
                %168 = vst [vmem:[%s148 + $0x48] sm:$0xff] %v167
                %v169 = vld [vmem:[%s147 + $0x50] sm:$0xff]
                %170 = vst [vmem:[%s148 + $0x50] sm:$0xff] %v169
                %v171 = vld [vmem:[%s147 + $0x58] sm:$0xff]
                %172 = vst [vmem:[%s148 + $0x58] sm:$0xff] %v171
                %v173 = vld [vmem:[%s147 + $0x60] sm:$0xff]
                %174 = vst [vmem:[%s148 + $0x60] sm:$0xff] %v173
                %v175 = vld [vmem:[%s147 + $0x68] sm:$0xff]
                %176 = vst [vmem:[%s148 + $0x68] sm:$0xff] %v175
                %v177 = vld [vmem:[%s147 + $0x70] sm:$0xff]
                %178 = vst [vmem:[%s148 + $0x70] sm:$0xff] %v177
                %v179 = vld [vmem:[%s147 + $0x78] sm:$0xff]
                %180 = vst [vmem:[%s148 + $0x78] sm:$0xff] %v179
                %v181 = vld [vmem:[%s147 + $0x100] sm:$0xff]
                %182 = vst [vmem:[%s148 + $0x80] sm:$0xff] %v181
                %v183 = vld [vmem:[%s147 + $0x108] sm:$0xff]
                %184 = vst [vmem:[%s148 + $0x88] sm:$0xff] %v183
                %v185 = vld [vmem:[%s147 + $0x110] sm:$0xff]
                %186 = vst [vmem:[%s148 + $0x90] sm:$0xff] %v185
                %v187 = vld [vmem:[%s147 + $0x118] sm:$0xff]
                %188 = vst [vmem:[%s148 + $0x98] sm:$0xff] %v187
                %v189 = vld [vmem:[%s147 + $0x120] sm:$0xff]
                %190 = vst [vmem:[%s148 + $0xa0] sm:$0xff] %v189
                %v191 = vld [vmem:[%s147 + $0x128] sm:$0xff]
                %192 = vst [vmem:[%s148 + $0xa8] sm:$0xff] %v191
                %v193 = vld [vmem:[%s147 + $0x130] sm:$0xff]
                %194 = vst [vmem:[%s148 + $0xb0] sm:$0xff] %v193
                %v195 = vld [vmem:[%s147 + $0x138] sm:$0xff]
                %196 = vst [vmem:[%s148 + $0xb8] sm:$0xff] %v195
                %v197 = vld [vmem:[%s147 + $0x140] sm:$0xff]
                %198 = vst [vmem:[%s148 + $0xc0] sm:$0xff] %v197
                %v199 = vld [vmem:[%s147 + $0x148] sm:$0xff]
                %200 = vst [vmem:[%s148 + $0xc8] sm:$0xff] %v199
                %v201 = vld [vmem:[%s147 + $0x150] sm:$0xff]
                %202 = vst [vmem:[%s148 + $0xd0] sm:$0xff] %v201
                %v203 = vld [vmem:[%s147 + $0x158] sm:$0xff]
                %204 = vst [vmem:[%s148 + $0xd8] sm:$0xff] %v203
                %v205 = vld [vmem:[%s147 + $0x160] sm:$0xff]
                %206 = vst [vmem:[%s148 + $0xe0] sm:$0xff] %v205
                %v207 = vld [vmem:[%s147 + $0x168] sm:$0xff]
                %208 = vst [vmem:[%s148 + $0xe8] sm:$0xff] %v207
                %v209 = vld [vmem:[%s147 + $0x170] sm:$0xff]
                %210 = vst [vmem:[%s148 + $0xf0] sm:$0xff] %v209
                %v211 = vld [vmem:[%s147 + $0x178] sm:$0xff]
                %212 = vst [vmem:[%s148 + $0xf8] sm:$0xff] %v211
                %v213 = vld [vmem:[%s147 + $0x200] sm:$0xff]
                %214 = vst [vmem:[%s148 + $0x100] sm:$0xff] %v213
                %v215 = vld [vmem:[%s147 + $0x208] sm:$0xff]
                %216 = vst [vmem:[%s148 + $0x108] sm:$0xff] %v215
                %v217 = vld [vmem:[%s147 + $0x210] sm:$0xff]
                %218 = vst [vmem:[%s148 + $0x110] sm:$0xff] %v217
                %v219 = vld [vmem:[%s147 + $0x218] sm:$0xff]
                %220 = vst [vmem:[%s148 + $0x118] sm:$0xff] %v219
                %v221 = vld [vmem:[%s147 + $0x220] sm:$0xff]
                %222 = vst [vmem:[%s148 + $0x120] sm:$0xff] %v221
                %v223 = vld [vmem:[%s147 + $0x228] sm:$0xff]
                %224 = vst [vmem:[%s148 + $0x128] sm:$0xff] %v223
                %v225 = vld [vmem:[%s147 + $0x230] sm:$0xff]
                %226 = vst [vmem:[%s148 + $0x130] sm:$0xff] %v225
                %v227 = vld [vmem:[%s147 + $0x238] sm:$0xff]
                %228 = vst [vmem:[%s148 + $0x138] sm:$0xff] %v227
                %v229 = vld [vmem:[%s147 + $0x240] sm:$0xff]
                %230 = vst [vmem:[%s148 + $0x140] sm:$0xff] %v229
                %v231 = vld [vmem:[%s147 + $0x248] sm:$0xff]
                %232 = vst [vmem:[%s148 + $0x148] sm:$0xff] %v231
                %v233 = vld [vmem:[%s147 + $0x250] sm:$0xff]
                %234 = vst [vmem:[%s148 + $0x150] sm:$0xff] %v233
                %v235 = vld [vmem:[%s147 + $0x258] sm:$0xff]
                %236 = vst [vmem:[%s148 + $0x158] sm:$0xff] %v235
                %v237 = vld [vmem:[%s147 + $0x260] sm:$0xff]
                %238 = vst [vmem:[%s148 + $0x160] sm:$0xff] %v237
                %v239 = vld [vmem:[%s147 + $0x268] sm:$0xff]
                %240 = vst [vmem:[%s148 + $0x168] sm:$0xff] %v239
                %v241 = vld [vmem:[%s147 + $0x270] sm:$0xff]
                %242 = vst [vmem:[%s148 + $0x170] sm:$0xff] %v241
                %v243 = vld [vmem:[%s147 + $0x278] sm:$0xff]
                %244 = vst [vmem:[%s148 + $0x178] sm:$0xff] %v243
                %v245 = vld [vmem:[%s147 + $0x300] sm:$0xff]
                %246 = vst [vmem:[%s148 + $0x180] sm:$0xff] %v245
                %v247 = vld [vmem:[%s147 + $0x308] sm:$0xff]
                %248 = vst [vmem:[%s148 + $0x188] sm:$0xff] %v247
                %v249 = vld [vmem:[%s147 + $0x310] sm:$0xff]
                %250 = vst [vmem:[%s148 + $0x190] sm:$0xff] %v249
                %v251 = vld [vmem:[%s147 + $0x318] sm:$0xff]
                %252 = vst [vmem:[%s148 + $0x198] sm:$0xff] %v251
                %v253 = vld [vmem:[%s147 + $0x320] sm:$0xff]
                %254 = vst [vmem:[%s148 + $0x1a0] sm:$0xff] %v253
                %v255 = vld [vmem:[%s147 + $0x328] sm:$0xff]
                %256 = vst [vmem:[%s148 + $0x1a8] sm:$0xff] %v255
                %v257 = vld [vmem:[%s147 + $0x330] sm:$0xff]
                %258 = vst [vmem:[%s148 + $0x1b0] sm:$0xff] %v257
                %v259 = vld [vmem:[%s147 + $0x338] sm:$0xff]
                %260 = vst [vmem:[%s148 + $0x1b8] sm:$0xff] %v259
                %v261 = vld [vmem:[%s147 + $0x340] sm:$0xff]
                %262 = vst [vmem:[%s148 + $0x1c0] sm:$0xff] %v261
                %v263 = vld [vmem:[%s147 + $0x348] sm:$0xff]
                %264 = vst [vmem:[%s148 + $0x1c8] sm:$0xff] %v263
                %v265 = vld [vmem:[%s147 + $0x350] sm:$0xff]
                %266 = vst [vmem:[%s148 + $0x1d0] sm:$0xff] %v265
                %v267 = vld [vmem:[%s147 + $0x358] sm:$0xff]
                %268 = vst [vmem:[%s148 + $0x1d8] sm:$0xff] %v267
                %v269 = vld [vmem:[%s147 + $0x360] sm:$0xff]
                %270 = vst [vmem:[%s148 + $0x1e0] sm:$0xff] %v269
                %v271 = vld [vmem:[%s147 + $0x368] sm:$0xff]
                %272 = vst [vmem:[%s148 + $0x1e8] sm:$0xff] %v271
                %v273 = vld [vmem:[%s147 + $0x370] sm:$0xff]
                %274 = vst [vmem:[%s148 + $0x1f0] sm:$0xff] %v273
                %v275 = vld [vmem:[%s147 + $0x378] sm:$0xff]
                %276 = vst [vmem:[%s148 + $0x1f8] sm:$0xff] %v275
              $region37: #{tpu_custom_call.1} parent=31 // loop_footer
                %s146 = sadd.s32 1, %s142
              $region38: #{tpu_custom_call.1} parent=31 // loop_footer_branch
                %141 = sbr.rel target = $region34
              $region39: #{tpu_custom_call.1} parent=31 // loop_exit
                _
            $region32: #{tpu_custom_call.1} parent=23 // pred_fallthru
              _
          $region24: #{tpu_custom_call.1} parent=19 // pred_fallthru
            _
          %417 = vnop
        $region20: #{tpu_custom_call.1} parent=15 // pred_fallthru
          _
        // Predicated region
        $region55: #{tpu_custom_call.1} parent=15 // pred_check
          %p418 = pneg %p71
        $region56: #{tpu_custom_call.1} parent=15 // pred_check_branch
          %420 = sbr.rel (%p418) target = $region58
        $region57: #{tpu_custom_call.1} parent=15 // pred_region
          %s421 = sand.u32 %s61, 1
          %s422 = sand.u32 %s61, 1
          %s423 = smul.addr %s422, 4
          %s424 = scalar_lea.vmem [#allocation4], %s423
          %s425 = scalar_lea.vmem %s1, %s19
          // Predicated region
          $region59: #{tpu_custom_call.1} parent=57 // pred_check
            _
          $region60: #{tpu_custom_call.1} parent=57 // pred_check_branch
            %427 = sbr.rel (0) target = $region62
          $region61: #{tpu_custom_call.1} parent=57 // pred_region
            // Predicated region
            $region63: #{tpu_custom_call.1} parent=61 // pred_check
              _
            $region64: #{tpu_custom_call.1} parent=61 // pred_check_branch
              %429 = sbr.rel target = $region66
            $region65: #{tpu_custom_call.1} parent=61 // pred_region
              // Predicated region
              $region78: #{tpu_custom_call.1} parent=65 // pred_check
                _
              $region79: #{tpu_custom_call.1} parent=65 // pred_check_branch
                %450 = sbr.rel (0) target = $region81
              $region80: #{tpu_custom_call.1} parent=65 // pred_region
                loop: start=0, step=1, limit=1
                $region82: #{tpu_custom_call.1} parent=80 // loop_pre_header
                  _
                $region83: #{tpu_custom_call.1} parent=80 // loop_header
                  %s453 = sphi 0, %s457
                  %p454 = scmp.ge.s32.totalorder %s453, 1
                  %s458 = sphi %s425, %s425
                  %s459 = sphi %s424, %s424
                $region84: #{tpu_custom_call.1} parent=80 // loop_header_branch
                  %456 = sbr.rel (%p454) target = $region88
                $region85: #{tpu_custom_call.1} parent=80 // loop_body
                  %v460 = vld [vmem:[%s458] sm:$0x1]
                  %461 = vst [vmem:[%s459] sm:$0x1] %v460
                  %v462 = vld [vmem:[%s458 + $0x2] sm:$0x1]
                  %463 = vst [vmem:[%s459 + $0x1] sm:$0x1] %v462
                  %v464 = vld [vmem:[%s458 + $0x4] sm:$0x1]
                  %465 = vst [vmem:[%s459 + $0x2] sm:$0x1] %v464
                  %v466 = vld [vmem:[%s458 + $0x6] sm:$0x1]
                  %467 = vst [vmem:[%s459 + $0x3] sm:$0x1] %v466
                $region86: #{tpu_custom_call.1} parent=80 // loop_footer
                  %s457 = sadd.s32 1, %s453
                $region87: #{tpu_custom_call.1} parent=80 // loop_footer_branch
                  %452 = sbr.rel target = $region83
                $region88: #{tpu_custom_call.1} parent=80 // loop_exit
                  _
              $region81: #{tpu_custom_call.1} parent=65 // pred_fallthru
                _
            $region66: #{tpu_custom_call.1} parent=61 // pred_fallthru
              _
            // Predicated region
            $region67: #{tpu_custom_call.1} parent=61 // pred_check
              _
            $region68: #{tpu_custom_call.1} parent=61 // pred_check_branch
              %431 = sbr.rel (0) target = $region70
            $region69: #{tpu_custom_call.1} parent=61 // pred_region
              loop: start=0, step=1, limit=1
              $region71: #{tpu_custom_call.1} parent=69 // loop_pre_header
                _
              $region72: #{tpu_custom_call.1} parent=69 // loop_header
                %s434 = sphi 0, %s438
                %p435 = scmp.ge.s32.totalorder %s434, 1
                %s439 = sphi %s425, %s425
                %s440 = sphi %s424, %s424
              $region73: #{tpu_custom_call.1} parent=69 // loop_header_branch
                %437 = sbr.rel (%p435) target = $region77
              $region74: #{tpu_custom_call.1} parent=69 // loop_body
                %v441 = vld [vmem:[%s439] sm:$0x1]
                %442 = vst [vmem:[%s440] sm:$0x1] %v441
                %v443 = vld [vmem:[%s439 + $0x2] sm:$0x1]
                %444 = vst [vmem:[%s440 + $0x1] sm:$0x1] %v443
                %v445 = vld [vmem:[%s439 + $0x4] sm:$0x1]
                %446 = vst [vmem:[%s440 + $0x2] sm:$0x1] %v445
                %v447 = vld [vmem:[%s439 + $0x6] sm:$0x1]
                %448 = vst [vmem:[%s440 + $0x3] sm:$0x1] %v447
              $region75: #{tpu_custom_call.1} parent=69 // loop_footer
                %s438 = sadd.s32 1, %s434
              $region76: #{tpu_custom_call.1} parent=69 // loop_footer_branch
                %433 = sbr.rel target = $region72
              $region77: #{tpu_custom_call.1} parent=69 // loop_exit
                _
            $region70: #{tpu_custom_call.1} parent=61 // pred_fallthru
              _
          $region62: #{tpu_custom_call.1} parent=57 // pred_fallthru
            _
          %468 = vnop
        $region58: #{tpu_custom_call.1} parent=15 // pred_fallthru
          _
      $region16: #{tpu_custom_call.1} parent=5 // pred_fallthru
        _
      %p469 = scmp.le.s32.totalorder 1, %s11
      %p470 = scmp.lt.s32.totalorder %s11, 9
      %p471 = pnand %p469, %p470
      %p472 = pneg %p471
      // Predicated region
      $region89: #{tpu_custom_call.1} parent=5 // pred_check
        _
      $region90: #{tpu_custom_call.1} parent=5 // pred_check_branch
        %474 = sbr.rel (%p471) target = $region92
      $region91: #{tpu_custom_call.1} parent=5 // pred_region
        %s475 = ssub.s32 %s11, 1
        %s476 = sand.u32 %s38, 1
        %s477 = sand.u32 %s38, 1
        %s478 = smul.addr %s477, 512
        %s479 = scalar_lea.vmem [#allocation3], %s478
        // Predicated region
        $region93: #{tpu_custom_call.1} parent=91 // pred_check
          %p480 = pneg %p51
        $region94: #{tpu_custom_call.1} parent=91 // pred_check_branch
          %482 = sbr.rel (%p480) target = $region96
        $region95: #{tpu_custom_call.1} parent=91 // pred_region
          _
        $region96: #{tpu_custom_call.1} parent=91 // pred_fallthru
          _
        %s483 = sand.u32 %s64, 1
        %s484 = sand.u32 %s64, 1
        %s485 = smul.addr %s484, 4
        %s486 = scalar_lea.vmem [#allocation4], %s485
        // Predicated region
        $region97: #{tpu_custom_call.1} parent=91 // pred_check
          %p487 = pneg %p77
        $region98: #{tpu_custom_call.1} parent=91 // pred_check_branch
          %489 = sbr.rel (%p487) target = $region100
        $region99: #{tpu_custom_call.1} parent=91 // pred_region
          _
        $region100: #{tpu_custom_call.1} parent=91 // pred_fallthru
          _
        %s490 = sand.u32 %s38, 1
        %s491 = sand.u32 %s38, 1
        %s492 = smul.addr %s491, 512
        %s493 = scalar_lea.vmem [#allocation3], %s492
        %p494 = pneg %p51
        %p495 = pneg %p48
        %s496 = sand.u32 %s64, 1
        %s497 = sand.u32 %s64, 1
        %s498 = smul.addr %s497, 4
        %s499 = scalar_lea.vmem [#allocation4], %s498
        %p500 = pneg %p77
        %p501 = pneg %p74
        %p502 = pneg %p103
        %p503 = pneg %p100
        %s504 = sand.u32 %s90, 1
        %s505 = scalar_lea.sflag [#allocation6], %s504
        %s506 = sand.u32 %s90, 1
        %s507 = smul.addr %s506, 4
        %s508 = scalar_lea.vmem [#allocation5], %s507
        %s509 = smul.u32 16, %s21
        %p510 = scmp.eq.s32.totalorder %s21, 0
        // Predicated region
        $region101: #{tpu_custom_call.1} parent=91 // pred_check
          %p511 = pneg %p510
        $region102: #{tpu_custom_call.1} parent=91 // pred_check_branch
          %513 = sbr.rel (%p511) target = $region104
        $region103: #{tpu_custom_call.1} parent=91 // pred_region
          %vm514 = vcmask 253952
          %515 = vst.msk [vmem:[#allocation2] sm:$0x1] %vm514, 0.0
          %516 = vst.msk [vmem:[#allocation2 + $0x1] sm:$0x1] %vm514, 0.0
          %517 = vst.msk [vmem:[#allocation2 + $0x2] sm:$0x1] %vm514, 0.0
          %518 = vst.msk [vmem:[#allocation2 + $0x3] sm:$0x1] %vm514, 0.0
        $region104: #{tpu_custom_call.1} parent=91 // pred_fallthru
          _
        %v519 = vld [vmem:[%s479] sm:$0xff]
        %v520 = vld [vmem:[%s479 + $0x8] sm:$0xff]
        %v521 = vld [vmem:[%s479 + $0x10] sm:$0xff]
        %v522 = vld [vmem:[%s479 + $0x18] sm:$0xff]
        %v523 = vld [vmem:[%s479 + $0x20] sm:$0xff]
        %v524 = vld [vmem:[%s479 + $0x28] sm:$0xff]
        %v525 = vld [vmem:[%s479 + $0x30] sm:$0xff]
        %v526 = vld [vmem:[%s479 + $0x38] sm:$0xff]
        %v527 = vld [vmem:[%s479 + $0x40] sm:$0xff]
        %v528 = vld [vmem:[%s479 + $0x48] sm:$0xff]
        %v529 = vld [vmem:[%s479 + $0x50] sm:$0xff]
        %v530 = vld [vmem:[%s479 + $0x58] sm:$0xff]
        %v531 = vld [vmem:[%s479 + $0x60] sm:$0xff]
        %v532 = vld [vmem:[%s479 + $0x68] sm:$0xff]
        %v533 = vld [vmem:[%s479 + $0x70] sm:$0xff]
        %v534 = vld [vmem:[%s479 + $0x78] sm:$0xff]
        %v535 = vld [vmem:[%s479 + $0x80] sm:$0xff]
        %v536 = vld [vmem:[%s479 + $0x88] sm:$0xff]
        %v537 = vld [vmem:[%s479 + $0x90] sm:$0xff]
        %v538 = vld [vmem:[%s479 + $0x98] sm:$0xff]
        %v539 = vld [vmem:[%s479 + $0xa0] sm:$0xff]
        %v540 = vld [vmem:[%s479 + $0xa8] sm:$0xff]
        %v541 = vld [vmem:[%s479 + $0xb0] sm:$0xff]
        %v542 = vld [vmem:[%s479 + $0xb8] sm:$0xff]
        %v543 = vld [vmem:[%s479 + $0xc0] sm:$0xff]
        %v544 = vld [vmem:[%s479 + $0xc8] sm:$0xff]
        %v545 = vld [vmem:[%s479 + $0xd0] sm:$0xff]
        %v546 = vld [vmem:[%s479 + $0xd8] sm:$0xff]
        %v547 = vld [vmem:[%s479 + $0xe0] sm:$0xff]
        %v548 = vld [vmem:[%s479 + $0xe8] sm:$0xff]
        %v549 = vld [vmem:[%s479 + $0xf0] sm:$0xff]
        %v550 = vld [vmem:[%s479 + $0xf8] sm:$0xff]
        %v551 = vld [vmem:[%s479 + $0x100] sm:$0xff]
        %v552 = vld [vmem:[%s479 + $0x108] sm:$0xff]
        %v553 = vld [vmem:[%s479 + $0x110] sm:$0xff]
        %v554 = vld [vmem:[%s479 + $0x118] sm:$0xff]
        %v555 = vld [vmem:[%s479 + $0x120] sm:$0xff]
        %v556 = vld [vmem:[%s479 + $0x128] sm:$0xff]
        %v557 = vld [vmem:[%s479 + $0x130] sm:$0xff]
        %v558 = vld [vmem:[%s479 + $0x138] sm:$0xff]
        %v559 = vld [vmem:[%s479 + $0x140] sm:$0xff]
        %v560 = vld [vmem:[%s479 + $0x148] sm:$0xff]
        %v561 = vld [vmem:[%s479 + $0x150] sm:$0xff]
        %v562 = vld [vmem:[%s479 + $0x158] sm:$0xff]
        %v563 = vld [vmem:[%s479 + $0x160] sm:$0xff]
        %v564 = vld [vmem:[%s479 + $0x168] sm:$0xff]
        %v565 = vld [vmem:[%s479 + $0x170] sm:$0xff]
        %v566 = vld [vmem:[%s479 + $0x178] sm:$0xff]
        %v567 = vld [vmem:[%s479 + $0x180] sm:$0xff]
        %v568 = vld [vmem:[%s479 + $0x188] sm:$0xff]
        %v569 = vld [vmem:[%s479 + $0x190] sm:$0xff]
        %v570 = vld [vmem:[%s479 + $0x198] sm:$0xff]
        %v571 = vld [vmem:[%s479 + $0x1a0] sm:$0xff]
        %v572 = vld [vmem:[%s479 + $0x1a8] sm:$0xff]
        %v573 = vld [vmem:[%s479 + $0x1b0] sm:$0xff]
        %v574 = vld [vmem:[%s479 + $0x1b8] sm:$0xff]
        %v575 = vld [vmem:[%s479 + $0x1c0] sm:$0xff]
        %v576 = vld [vmem:[%s479 + $0x1c8] sm:$0xff]
        %v577 = vld [vmem:[%s479 + $0x1d0] sm:$0xff]
        %v578 = vld [vmem:[%s479 + $0x1d8] sm:$0xff]
        %v579 = vld [vmem:[%s479 + $0x1e0] sm:$0xff]
        %v580 = vld [vmem:[%s479 + $0x1e8] sm:$0xff]
        %v581 = vld [vmem:[%s479 + $0x1f0] sm:$0xff]
        %v582 = vld [vmem:[%s479 + $0x1f8] sm:$0xff]
        %v583 = vld [vmem:[%s486] sm:$0x1]
        %v584 = vld [vmem:[%s486 + $0x1] sm:$0x1]
        %v585 = vld [vmem:[%s486 + $0x2] sm:$0x1]
        %v586 = vld [vmem:[%s486 + $0x3] sm:$0x1]
        %v587 = vld [vmem:[#allocation2] sm:$0x1]
        %v588 = vld [vmem:[#allocation2 + $0x1] sm:$0x1]
        %v589 = vld [vmem:[#allocation2 + $0x2] sm:$0x1]
        %v590 = vld [vmem:[#allocation2 + $0x3] sm:$0x1]
        %591 = vmatprep.subr.mxu0 0.0
        %592 = vmatpush1.msra.mxu0 %v519
        %593 = vmatprep.subr.mxu0 0.0
        %594 = vmatpush1.msra.mxu0 %v520
        %595 = vmatprep.subr.mxu0 0.0
        %596 = vmatpush1.msra.mxu0 %v521
        %597 = vmatprep.subr.mxu0 0.0
        %598 = vmatpush1.msra.mxu0 %v522
        %599 = vmatprep.subr.mxu0 0.0
        %600 = vmatpush1.msra.mxu0 %v523
        %601 = vmatprep.subr.mxu0 0.0
        %602 = vmatpush1.msra.mxu0 %v524
        %603 = vmatprep.subr.mxu0 0.0
        %604 = vmatpush1.msra.mxu0 %v525
        %605 = vmatprep.subr.mxu0 0.0
        %606 = vmatpush1.msra.mxu0 %v526
        %607 = vmatprep.subr.mxu0 0.0
        %608 = vmatpush1.msra.mxu0 %v527
        %609 = vmatprep.subr.mxu0 0.0
        %610 = vmatpush1.msra.mxu0 %v528
        %611 = vmatprep.subr.mxu0 0.0
        %612 = vmatpush1.msra.mxu0 %v529
        %613 = vmatprep.subr.mxu0 0.0
        %614 = vmatpush1.msra.mxu0 %v530
        %615 = vmatprep.subr.mxu0 0.0
        %616 = vmatpush1.msra.mxu0 %v531
        %617 = vmatprep.subr.mxu0 0.0
        %618 = vmatpush1.msra.mxu0 %v532
        %619 = vmatprep.subr.mxu0 0.0
        %620 = vmatpush1.msra.mxu0 %v533
        %621 = vmatprep.subr.mxu0 0.0
        %622 = vmatpush1.msra.mxu0 %v534
        %623 = vmatprep.subr.mxu0 0.0
        %624 = vmatpush1.msra.mxu0 0.0
        %625 = vmatprep.subr.mxu0 0.0
        %626 = vmatpush1.msra.mxu0 0.0
        %627 = vmatprep.subr.mxu0 0.0
        %628 = vmatpush1.msra.mxu0 0.0
        %629 = vmatprep.subr.mxu0 0.0
        %630 = vmatpush1.msra.mxu0 0.0
        %631 = vmatprep.subr.mxu0 0.0
        %632 = vmatpush1.msra.mxu0 0.0
        %633 = vmatprep.subr.mxu0 0.0
        %634 = vmatpush1.msra.mxu0 0.0
        %635 = vmatprep.subr.mxu0 0.0
        %636 = vmatpush1.msra.mxu0 0.0
        %637 = vmatprep.subr.mxu0 0.0
        %638 = vmatpush1.msra.mxu0 0.0
        %639 = vmatprep.subr.mxu0 0.0
        %640 = vmatpush1.msra.mxu0 0.0
        %641 = vmatprep.subr.mxu0 0.0
        %642 = vmatpush1.msra.mxu0 0.0
        %643 = vmatprep.subr.mxu0 0.0
        %644 = vmatpush1.msra.mxu0 0.0
        %645 = vmatprep.subr.mxu0 0.0
        %646 = vmatpush1.msra.mxu0 0.0
        %647 = vmatprep.subr.mxu0 0.0
        %648 = vmatpush1.msra.mxu0 0.0
        %649 = vmatprep.subr.mxu0 0.0
        %650 = vmatpush1.msra.mxu0 0.0
        %651 = vmatprep.subr.mxu0 0.0
        %652 = vmatpush1.msra.mxu0 0.0
        %653 = vmatprep.subr.mxu0 0.0
        %654 = vmatpush1.msra.mxu0 0.0
        %655 = vmatprep.mubr.f32.mxu0 0.0
        %656 = vmatmul.mubr.f32.gmra.mrb[0].mxu0 %v583
        %v657 = vpop.f32.mrb[0].mxu0
        %v658 = vadd.f32 0.0, %v657
        %v659 = vpop.f32.mrb[0].mxu0
        %660 = vdwg.mxu0
        %661 = vmatprep.subr.mxu0 0.0
        %662 = vmatpush1.msra.mxu0 %v535
        %663 = vmatprep.subr.mxu0 0.0
        %664 = vmatpush1.msra.mxu0 %v536
        %665 = vmatprep.subr.mxu0 0.0
        %666 = vmatpush1.msra.mxu0 %v537
        %667 = vmatprep.subr.mxu0 0.0
        %668 = vmatpush1.msra.mxu0 %v538
        %669 = vmatprep.subr.mxu0 0.0
        %670 = vmatpush1.msra.mxu0 %v539
        %671 = vmatprep.subr.mxu0 0.0
        %672 = vmatpush1.msra.mxu0 %v540
        %673 = vmatprep.subr.mxu0 0.0
        %674 = vmatpush1.msra.mxu0 %v541
        %675 = vmatprep.subr.mxu0 0.0
        %676 = vmatpush1.msra.mxu0 %v542
        %677 = vmatprep.subr.mxu0 0.0
        %678 = vmatpush1.msra.mxu0 %v543
        %679 = vmatprep.subr.mxu0 0.0
        %680 = vmatpush1.msra.mxu0 %v544
        %681 = vmatprep.subr.mxu0 0.0
        %682 = vmatpush1.msra.mxu0 %v545
        %683 = vmatprep.subr.mxu0 0.0
        %684 = vmatpush1.msra.mxu0 %v546
        %685 = vmatprep.subr.mxu0 0.0
        %686 = vmatpush1.msra.mxu0 %v547
        %687 = vmatprep.subr.mxu0 0.0
        %688 = vmatpush1.msra.mxu0 %v548
        %689 = vmatprep.subr.mxu0 0.0
        %690 = vmatpush1.msra.mxu0 %v549
        %691 = vmatprep.subr.mxu0 0.0
        %692 = vmatpush1.msra.mxu0 %v550
        %693 = vmatprep.subr.mxu0 0.0
        %694 = vmatpush1.msra.mxu0 0.0
        %695 = vmatprep.subr.mxu0 0.0
        %696 = vmatpush1.msra.mxu0 0.0
        %697 = vmatprep.subr.mxu0 0.0
        %698 = vmatpush1.msra.mxu0 0.0
        %699 = vmatprep.subr.mxu0 0.0
        %700 = vmatpush1.msra.mxu0 0.0
        %701 = vmatprep.subr.mxu0 0.0
        %702 = vmatpush1.msra.mxu0 0.0
        %703 = vmatprep.subr.mxu0 0.0
        %704 = vmatpush1.msra.mxu0 0.0
        %705 = vmatprep.subr.mxu0 0.0
        %706 = vmatpush1.msra.mxu0 0.0
        %707 = vmatprep.subr.mxu0 0.0
        %708 = vmatpush1.msra.mxu0 0.0
        %709 = vmatprep.subr.mxu0 0.0
        %710 = vmatpush1.msra.mxu0 0.0
        %711 = vmatprep.subr.mxu0 0.0
        %712 = vmatpush1.msra.mxu0 0.0
        %713 = vmatprep.subr.mxu0 0.0
        %714 = vmatpush1.msra.mxu0 0.0
        %715 = vmatprep.subr.mxu0 0.0
        %716 = vmatpush1.msra.mxu0 0.0
        %717 = vmatprep.subr.mxu0 0.0
        %718 = vmatpush1.msra.mxu0 0.0
        %719 = vmatprep.subr.mxu0 0.0
        %720 = vmatpush1.msra.mxu0 0.0
        %721 = vmatprep.subr.mxu0 0.0
        %722 = vmatpush1.msra.mxu0 0.0
        %723 = vmatprep.subr.mxu0 0.0
        %724 = vmatpush1.msra.mxu0 0.0
        %725 = vmatprep.mubr.f32.mxu0 0.0
        %726 = vmatmul.mubr.f32.gmra.mrb[0].mxu0 %v584
        %v727 = vpop.f32.mrb[0].mxu0
        %v728 = vadd.f32 0.0, %v727
        %v729 = vpop.f32.mrb[0].mxu0
        %730 = vdwg.mxu0
        %731 = vmatprep.subr.mxu0 0.0
        %732 = vmatpush1.msra.mxu0 %v551
        %733 = vmatprep.subr.mxu0 0.0
        %734 = vmatpush1.msra.mxu0 %v552
        %735 = vmatprep.subr.mxu0 0.0
        %736 = vmatpush1.msra.mxu0 %v553
        %737 = vmatprep.subr.mxu0 0.0
        %738 = vmatpush1.msra.mxu0 %v554
        %739 = vmatprep.subr.mxu0 0.0
        %740 = vmatpush1.msra.mxu0 %v555
        %741 = vmatprep.subr.mxu0 0.0
        %742 = vmatpush1.msra.mxu0 %v556
        %743 = vmatprep.subr.mxu0 0.0
        %744 = vmatpush1.msra.mxu0 %v557
        %745 = vmatprep.subr.mxu0 0.0
        %746 = vmatpush1.msra.mxu0 %v558
        %747 = vmatprep.subr.mxu0 0.0
        %748 = vmatpush1.msra.mxu0 %v559
        %749 = vmatprep.subr.mxu0 0.0
        %750 = vmatpush1.msra.mxu0 %v560
        %751 = vmatprep.subr.mxu0 0.0
        %752 = vmatpush1.msra.mxu0 %v561
        %753 = vmatprep.subr.mxu0 0.0
        %754 = vmatpush1.msra.mxu0 %v562
        %755 = vmatprep.subr.mxu0 0.0
        %756 = vmatpush1.msra.mxu0 %v563
        %757 = vmatprep.subr.mxu0 0.0
        %758 = vmatpush1.msra.mxu0 %v564
        %759 = vmatprep.subr.mxu0 0.0
        %760 = vmatpush1.msra.mxu0 %v565
        %761 = vmatprep.subr.mxu0 0.0
        %762 = vmatpush1.msra.mxu0 %v566
        %763 = vmatprep.subr.mxu0 0.0
        %764 = vmatpush1.msra.mxu0 0.0
        %765 = vmatprep.subr.mxu0 0.0
        %766 = vmatpush1.msra.mxu0 0.0
        %767 = vmatprep.subr.mxu0 0.0
        %768 = vmatpush1.msra.mxu0 0.0
        %769 = vmatprep.subr.mxu0 0.0
        %770 = vmatpush1.msra.mxu0 0.0
        %771 = vmatprep.subr.mxu0 0.0
        %772 = vmatpush1.msra.mxu0 0.0
        %773 = vmatprep.subr.mxu0 0.0
        %774 = vmatpush1.msra.mxu0 0.0
        %775 = vmatprep.subr.mxu0 0.0
        %776 = vmatpush1.msra.mxu0 0.0
        %777 = vmatprep.subr.mxu0 0.0
        %778 = vmatpush1.msra.mxu0 0.0
        %779 = vmatprep.subr.mxu0 0.0
        %780 = vmatpush1.msra.mxu0 0.0
        %781 = vmatprep.subr.mxu0 0.0
        %782 = vmatpush1.msra.mxu0 0.0
        %783 = vmatprep.subr.mxu0 0.0
        %784 = vmatpush1.msra.mxu0 0.0
        %785 = vmatprep.subr.mxu0 0.0
        %786 = vmatpush1.msra.mxu0 0.0
        %787 = vmatprep.subr.mxu0 0.0
        %788 = vmatpush1.msra.mxu0 0.0
        %789 = vmatprep.subr.mxu0 0.0
        %790 = vmatpush1.msra.mxu0 0.0
        %791 = vmatprep.subr.mxu0 0.0
        %792 = vmatpush1.msra.mxu0 0.0
        %793 = vmatprep.subr.mxu0 0.0
        %794 = vmatpush1.msra.mxu0 0.0
        %795 = vmatprep.mubr.f32.mxu0 0.0
        %796 = vmatmul.mubr.f32.gmra.mrb[0].mxu0 %v585
        %v797 = vpop.f32.mrb[0].mxu0
        %v798 = vadd.f32 0.0, %v797
        %v799 = vpop.f32.mrb[0].mxu0
        %800 = vdwg.mxu0
        %801 = vmatprep.subr.mxu0 0.0
        %802 = vmatpush1.msra.mxu0 %v567
        %803 = vmatprep.subr.mxu0 0.0
        %804 = vmatpush1.msra.mxu0 %v568
        %805 = vmatprep.subr.mxu0 0.0
        %806 = vmatpush1.msra.mxu0 %v569
        %807 = vmatprep.subr.mxu0 0.0
        %808 = vmatpush1.msra.mxu0 %v570
        %809 = vmatprep.subr.mxu0 0.0
        %810 = vmatpush1.msra.mxu0 %v571
        %811 = vmatprep.subr.mxu0 0.0
        %812 = vmatpush1.msra.mxu0 %v572
        %813 = vmatprep.subr.mxu0 0.0
        %814 = vmatpush1.msra.mxu0 %v573
        %815 = vmatprep.subr.mxu0 0.0
        %816 = vmatpush1.msra.mxu0 %v574
        %817 = vmatprep.subr.mxu0 0.0
        %818 = vmatpush1.msra.mxu0 %v575
        %819 = vmatprep.subr.mxu0 0.0
        %820 = vmatpush1.msra.mxu0 %v576
        %821 = vmatprep.subr.mxu0 0.0
        %822 = vmatpush1.msra.mxu0 %v577
        %823 = vmatprep.subr.mxu0 0.0
        %824 = vmatpush1.msra.mxu0 %v578
        %825 = vmatprep.subr.mxu0 0.0
        %826 = vmatpush1.msra.mxu0 %v579
        %827 = vmatprep.subr.mxu0 0.0
        %828 = vmatpush1.msra.mxu0 %v580
        %829 = vmatprep.subr.mxu0 0.0
        %830 = vmatpush1.msra.mxu0 %v581
        %831 = vmatprep.subr.mxu0 0.0
        %832 = vmatpush1.msra.mxu0 %v582
        %833 = vmatprep.subr.mxu0 0.0
        %834 = vmatpush1.msra.mxu0 0.0
        %835 = vmatprep.subr.mxu0 0.0
        %836 = vmatpush1.msra.mxu0 0.0
        %837 = vmatprep.subr.mxu0 0.0
        %838 = vmatpush1.msra.mxu0 0.0
        %839 = vmatprep.subr.mxu0 0.0
        %840 = vmatpush1.msra.mxu0 0.0
        %841 = vmatprep.subr.mxu0 0.0
        %842 = vmatpush1.msra.mxu0 0.0
        %843 = vmatprep.subr.mxu0 0.0
        %844 = vmatpush1.msra.mxu0 0.0
        %845 = vmatprep.subr.mxu0 0.0
        %846 = vmatpush1.msra.mxu0 0.0
        %847 = vmatprep.subr.mxu0 0.0
        %848 = vmatpush1.msra.mxu0 0.0
        %849 = vmatprep.subr.mxu0 0.0
        %850 = vmatpush1.msra.mxu0 0.0
        %851 = vmatprep.subr.mxu0 0.0
        %852 = vmatpush1.msra.mxu0 0.0
        %853 = vmatprep.subr.mxu0 0.0
        %854 = vmatpush1.msra.mxu0 0.0
        %855 = vmatprep.subr.mxu0 0.0
        %856 = vmatpush1.msra.mxu0 0.0
        %857 = vmatprep.subr.mxu0 0.0
        %858 = vmatpush1.msra.mxu0 0.0
        %859 = vmatprep.subr.mxu0 0.0
        %860 = vmatpush1.msra.mxu0 0.0
        %861 = vmatprep.subr.mxu0 0.0
        %862 = vmatpush1.msra.mxu0 0.0
        %863 = vmatprep.subr.mxu0 0.0
        %864 = vmatpush1.msra.mxu0 0.0
        %865 = vmatprep.mubr.f32.mxu0 0.0
        %866 = vmatmul.mubr.f32.gmra.mrb[0].mxu0 %v586
        %v867 = vpop.f32.mrb[0].mxu0
        %v868 = vadd.f32 0.0, %v867
        %v869 = vpop.f32.mrb[0].mxu0
        %870 = vdwg.mxu0
        %v871 = vadd.f32 %v587, %v658
        %v872 = vadd.f32 %v588, %v728
        %v873 = vadd.f32 %v589, %v798
        %v874 = vadd.f32 %v590, %v868
        %vm875 = vcmask 253952
        %876 = vst.msk [vmem:[#allocation2] sm:$0x1] %vm875, %v871
        %877 = vst.msk [vmem:[#allocation2 + $0x1] sm:$0x1] %vm875, %v872
        %878 = vst.msk [vmem:[#allocation2 + $0x2] sm:$0x1] %vm875, %v873
        %879 = vst.msk [vmem:[#allocation2 + $0x3] sm:$0x1] %vm875, %v874
        %p880 = scmp.eq.s32.totalorder %s21, 1
        // Predicated region
        $region105: #{tpu_custom_call.1} parent=91 // pred_check
          %p881 = pneg %p880
        $region106: #{tpu_custom_call.1} parent=91 // pred_check_branch
          %883 = sbr.rel (%p881) target = $region108
        $region107: #{tpu_custom_call.1} parent=91 // pred_region
          %v884 = vld [vmem:[#allocation2] sm:$0x1]
          %v885 = vld [vmem:[#allocation2 + $0x1] sm:$0x1]
          %v886 = vld [vmem:[#allocation2 + $0x2] sm:$0x1]
          %v887 = vld [vmem:[#allocation2 + $0x3] sm:$0x1]
          %888 = vst.msk [vmem:[%s508] sm:$0x1] %vm875, %v884
          %889 = vst.msk [vmem:[%s508 + $0x1] sm:$0x1] %vm875, %v885
          %890 = vst.msk [vmem:[%s508 + $0x2] sm:$0x1] %vm875, %v886
          %891 = vst.msk [vmem:[%s508 + $0x3] sm:$0x1] %vm875, %v887
        $region108: #{tpu_custom_call.1} parent=91 // pred_fallthru
          _
        %s892 = sand.u32 %s90, 1
        %s893 = scalar_lea.sflag [#allocation6], %s892
        %s894 = sand.u32 %s90, 1
        %s895 = smul.addr %s894, 4
        %s896 = scalar_lea.vmem [#allocation5], %s895
        // Predicated region
        $region109: #{tpu_custom_call.1} parent=91 // pred_check
          %p897 = pneg %p100
        $region110: #{tpu_custom_call.1} parent=91 // pred_check_branch
          %899 = sbr.rel (%p897) target = $region112
        $region111: #{tpu_custom_call.1} parent=91 // pred_region
          %s901 = ssub.s32 64, 64
          %902 = vsyncadd %s893, %s901
          %s903 = smul.addr %s20, 4
          %s904 = smul.addr %s903, 16
          %s905 = scalar_lea.hbm %s2, %s904
          %s906 = sshll.u32 %s896, 4
          %s907 = int_to_ptr.vmem [resolvable:$true] %s906
          %912 = dma.vmem_to_hbm [thread:$0]  %s907, 64, %s905, %s893, 16, 16, 1
        $region112: #{tpu_custom_call.1} parent=91 // pred_fallthru
          _
      $region92: #{tpu_custom_call.1} parent=5 // pred_fallthru
        _
      %p913 = scmp.le.s32.totalorder 2, %s11
      // Predicated region
      $region113: #{tpu_custom_call.1} parent=5 // pred_check
        %p914 = pneg %p913
      $region114: #{tpu_custom_call.1} parent=5 // pred_check_branch
        %916 = sbr.rel (%p914) target = $region116
      $region115: #{tpu_custom_call.1} parent=5 // pred_region
        %s917 = ssub.s32 %s11, 2
        // Predicated region
        $region117: #{tpu_custom_call.1} parent=115 // pred_check
          %p918 = pneg %p106
        $region118: #{tpu_custom_call.1} parent=115 // pred_check_branch
          %920 = sbr.rel (%p918) target = $region120
        $region119: #{tpu_custom_call.1} parent=115 // pred_region
          %s921 = sand.u32 %s91, 1
          %s922 = scalar_lea.sflag [#allocation6], %s921
          %s923 = sand.u32 %s91, 1
          %s924 = smul.addr %s923, 4
          %s925 = scalar_lea.vmem [#allocation5], %s924
          %926 = dma.done %s922, 64
        $region120: #{tpu_custom_call.1} parent=115 // pred_fallthru
          _
      $region116: #{tpu_custom_call.1} parent=5 // pred_fallthru
        _
    $region6: #{tpu_custom_call.1} parent=1 // loop_footer
      %s15 = sadd.s32 1, %s11
    $region7: #{tpu_custom_call.1} parent=1 // loop_footer_branch
      %10 = sbr.rel target = $region3
    $region8: #{tpu_custom_call.1} parent=1 // loop_exit
      _
    %927 = vsyncpa [#allocation6], 1
    %s928 = scalar_lea.sflag [#allocation6], 1
    %929 = vsyncpa %s928, 1

</llo_original>
